<compile_context>
chip_gen: v7x
topology: tpu7x:2x2x1
jax: 0.10.0
libtpu: 0.0.40
codegen_flags: <defaults>
</compile_context>

<pallas_src>
import functools

import jax
import jax.numpy as jnp
from jax.experimental import pallas as pl
from jax.experimental.pallas import tpu as pltpu

LEAKY_SLOPE = 0.01   # nn.LeakyReLU default negative_slope
BN_EPS = 1e-5        # nn.BatchNorm1d default eps
LANE = 128


def _round_up(n, m):
    return (n + m - 1) // m * m


# ------------------------------ fused kernel ------------------------------- #

def _netwrapper_kernel(patches_ref, wconv_ref, bconv_ref, w1_ref,
                       gamma_ref, beta_ref, w2_ref, b2_ref, out_ref,
                       *, batch, hw):
    """Fused: conv-as-matmul -> ReLU -> global-avg-pool (sublane reduce) ->
    Linear -> BN(batch stats) -> LeakyReLU -> Linear.
    All feature axes are zero-padded to 128 lanes; padded lanes stay exactly
    zero through every stage, so slicing the output recovers the reference."""
    B, HW = batch, hw
    cpad = wconv_ref.shape[-1]

    # --- backbone conv 3x3 (same): lane-dense im2col matmul -----------------
    # patches_ref: (B*HW, kpad) bf16, built in the wrapper; wconv: (kpad, cpad).
    y = jnp.dot(patches_ref[...], wconv_ref[...],
                preferred_element_type=jnp.float32)
    y = jnp.maximum(y + bconv_ref[...], 0.0)                 # bias + ReLU (f32 VPU)

    # --- global average pool: reshape + sublane reduction (f32) -------------
    # Leading-dim split only (lane dim unchanged) -> cheap relabeling.
    rep = jnp.sum(y.reshape(B, HW, cpad), axis=1) * jnp.float32(1.0 / HW)
    # `rep` == flatten(hooked layer=-2 output); padded trailing lanes are zero.

    # --- projector MLP -------------------------------------------------------
    # Linear1 bias b1 is omitted: it is cancelled exactly by the BN mean
    # subtraction, so numerics are identical to the PyTorch reference.
    h1 = jnp.dot(rep.astype(jnp.bfloat16), w1_ref[...],
                 preferred_element_type=jnp.float32)
    # BatchNorm1d, training mode: biased variance over the batch axis.
    mean = jnp.mean(h1, axis=0, keepdims=True)
    var = jnp.mean((h1 - mean) ** 2, axis=0, keepdims=True)
    hn = (h1 - mean) * jax.lax.rsqrt(var + BN_EPS)
    hn = hn * gamma_ref[...] + beta_ref[...]
    # TODO(synk): BatchNorm1d running-stat buffer updates (momentum EMA) are a
    # training-mode side effect and are not materialized; they do not affect
    # the returned projection.
    act = jnp.where(hn >= 0, hn, LEAKY_SLOPE * hn)            # LeakyReLU(0.01)
    out_ref[...] = jnp.dot(act.astype(jnp.bfloat16), w2_ref[...],
                           preferred_element_type=jnp.float32) + b2_ref[...]


# ------------------------- parameters / module ----------------------------- #

def _uniform(key, shape, bound):
    return jax.random.uniform(key, shape, jnp.float32, minval=-bound, maxval=bound)


class NetWrapperPallas:
    """JAX/Pallas equivalent of NetWrapper(net, projection_size,
    projection_hidden_size, layer=-2) with a small synthetic backbone."""

    def __init__(self, key, in_ch, feat_ch, projection_size, projection_hidden_size):
        k = jax.random.split(key, 6)
        dim, hid, proj = feat_ch, projection_hidden_size, projection_size

        # ---- "PyTorch-like" f32 parameters (Conv2d / Linear default init) ----
        fan_conv = in_ch * 9
        self.conv_w = _uniform(k[0], (feat_ch, in_ch, 3, 3), fan_conv ** -0.5)
        self.conv_b = _uniform(k[1], (feat_ch,), fan_conv ** -0.5)
        # NOTE: the wrapped net's final classifier is intentionally not built:
        # NetWrapper discards `self.net(x)` when layer != -1.
        self.w1 = _uniform(k[2], (dim, hid), dim ** -0.5)
        self.b1 = _uniform(k[3], (1, hid), dim ** -0.5)   # kept for parity; cancelled by BN
        self.gamma = jnp.ones((1, hid), jnp.float32)      # BatchNorm1d weight
        self.beta = jnp.zeros((1, hid), jnp.float32)      # BatchNorm1d bias
        self.w2 = _uniform(k[4], (hid, proj), hid ** -0.5)
        self.b2 = _uniform(k[5], (1, proj), hid ** -0.5)

        # ---- MXU-ready, lane-padded (to 128) operands ----
        kpad = _round_up(9 * in_ch, LANE)
        cpad = _round_up(feat_ch, LANE)
        hpad = _round_up(hid, LANE)
        ppad = _round_up(proj, LANE)
        self._kpad, self._cpad, self._hpad, self._ppad = kpad, cpad, hpad, ppad
        self._proj = proj
        self._in_ch = in_ch

        # Conv weight as (9*Cin, Cout): row index = (dy*3+dx)*Cin + cin, which
        # matches the wrapper-side patch column order.  K and Cout both padded.
        wconv_mat = jnp.transpose(self.conv_w, (2, 3, 1, 0)).reshape(9 * in_ch, feat_ch)
        self._wconv = jnp.pad(wconv_mat, ((0, kpad - 9 * in_ch),
                                          (0, cpad - feat_ch))).astype(jnp.bfloat16)
        self._bconv = jnp.pad(self.conv_b.reshape(1, feat_ch), ((0, 0), (0, cpad - feat_ch)))
        self._w1 = jnp.pad(self.w1, ((0, cpad - dim), (0, hpad - hid))).astype(jnp.bfloat16)
        self._gamma = jnp.pad(self.gamma, ((0, 0), (0, hpad - hid)))
        self._beta = jnp.pad(self.beta, ((0, 0), (0, hpad - hid)))
        self._w2 = jnp.pad(self.w2, ((0, hpad - hid), (0, ppad - proj))).astype(jnp.bfloat16)
        self._b2 = jnp.pad(self.b2, ((0, 0), (0, ppad - proj)))
        # Zero-padding is exact: padded rep/hidden/proj lanes stay identically
        # zero through conv, pooling, BN (0-mean, 0-var columns normalize to 0),
        # LeakyReLU and both Linears, so slicing the output recovers the
        # reference result.

    def _im2col(self, x_nchw):
        """Lane-dense (B*HW, kpad) bf16 im2col patches, built with cheap XLA
        slices outside the kernel (HBM cost ~B*HW*kpad*2 bytes)."""
        B, Cin, H, W = x_nchw.shape
        x_nhwc = jnp.transpose(x_nchw, (0, 2, 3, 1))
        xp = jnp.pad(x_nhwc, ((0, 0), (1, 1), (1, 1), (0, 0)))
        taps = [xp[:, dy:dy + H, dx:dx + W, :] for dy in range(3) for dx in range(3)]
        patches = jnp.concatenate(taps, axis=-1).reshape(B * H * W, 9 * Cin)
        patches = jnp.pad(patches, ((0, 0), (0, self._kpad - 9 * Cin)))
        return patches.astype(jnp.bfloat16)

    def __call__(self, x_nchw):
        B, Cin, H, W = x_nchw.shape
        assert Cin == self._in_ch
        HW = H * W
        patches = self._im2col(x_nchw)

        kern = functools.partial(_netwrapper_kernel, batch=B, hw=HW)
        args = (patches, self._wconv, self._bconv, self._w1,
                self._gamma, self._beta, self._w2, self._b2)

        flops = (2 * B * HW * self._kpad * self._cpad        # conv matmul
                 + B * HW * self._cpad                       # pooling reduce
                 + 2 * B * self._cpad * self._hpad           # Linear 1
                 + 2 * B * self._hpad * self._ppad)          # Linear 2
        bytes_accessed = (sum(int(a.size) * a.dtype.itemsize for a in args)
                          + B * self._ppad * 4)

        out = pl.pallas_call(
            kern,
            out_shape=jax.ShapeDtypeStruct((B, self._ppad), jnp.float32),
            in_specs=[pl.BlockSpec(memory_space=pltpu.MemorySpace.VMEM)] * len(args),
            out_specs=pl.BlockSpec(memory_space=pltpu.MemorySpace.VMEM),
            compiler_params=pltpu.CompilerParams(vmem_limit_bytes=32 * 1024 * 1024),
            cost_estimate=pl.CostEstimate(flops=int(flops),
                                          transcendentals=int(self._hpad),
                                          bytes_accessed=int(bytes_accessed)),
        )(*args)
        return out[:, :self._proj]


# ---------------------------------- main ----------------------------------- #

if __name__ == "__main__":
    key = jax.random.PRNGKey(0)
    k_x, k_p = jax.random.split(key)

    # Small shapes consistent with the module: NCHW input, 4 channels, 16x16.
    x = jax.random.normal(k_x, (2, 4, 16, 16), jnp.float32)

    model = NetWrapperPallas(k_p, in_ch=4, feat_ch=8,
                             projection_size=16, projection_hidden_size=32)
    out = model(x)
    jax.block_until_ready(out)
    assert out.shape == (2, 16) and out.dtype == jnp.float32
    print("KERNEL_OK")
</pallas_src>

<mosaic_0001>
module attributes {stable_mosaic.version = 11 : i64} {
  func.func @_netwrapper_kernel(%arg0: memref<512x128xbf16, #tpu.memory_space<vmem>>, %arg1: memref<128x128xbf16, #tpu.memory_space<vmem>>, %arg2: memref<1x128xf32, #tpu.memory_space<vmem>>, %arg3: memref<128x128xbf16, #tpu.memory_space<vmem>>, %arg4: memref<1x128xf32, #tpu.memory_space<vmem>>, %arg5: memref<1x128xf32, #tpu.memory_space<vmem>>, %arg6: memref<128x128xbf16, #tpu.memory_space<vmem>>, %arg7: memref<1x128xf32, #tpu.memory_space<vmem>>, %arg8: memref<2x128xf32, #tpu.memory_space<vmem>>) attributes {dimension_semantics = [], scalar_prefetch = 0 : i64, scratch_operands = 0 : i64, tpu.core_type = #tpu.core_type<tc>} {
    %c0 = arith.constant 0 : index
    %c0_0 = arith.constant 0 : index
    %0 = vector.load %arg0[%c0, %c0_0] : memref<512x128xbf16, #tpu.memory_space<vmem>>, vector<512x128xbf16>
    %c0_1 = arith.constant 0 : index
    %c0_2 = arith.constant 0 : index
    %1 = vector.load %arg1[%c0_1, %c0_2] : memref<128x128xbf16, #tpu.memory_space<vmem>>, vector<128x128xbf16>
    %cst = arith.constant dense<0.000000e+00> : vector<512x128xf32>
    %2 = tpu.matmul %0, %1, %cst {dimension_numbers = #tpu.dot_dimension_numbers<[1], [0], [0], [1], [0, 0, 1, 1], [], []>} : vector<512x128xbf16>, vector<128x128xbf16>, vector<512x128xf32> -> vector<512x128xf32>
    %c0_3 = arith.constant 0 : index
    %c0_4 = arith.constant 0 : index
    %3 = vector.load %arg2[%c0_3, %c0_4] : memref<1x128xf32, #tpu.memory_space<vmem>>, vector<1x128xf32>
    %4 = vector.broadcast %3 : vector<1x128xf32> to vector<512x128xf32>
    %5 = arith.addf %2, %4 : vector<512x128xf32>
    %cst_5 = arith.constant 0.000000e+00 : f32
    %6 = vector.broadcast %cst_5 : f32 to vector<512x128xf32>
    %7 = arith.maximumf %5, %6 : vector<512x128xf32>
    %8 = vector.shape_cast %7 : vector<512x128xf32> to vector<2x256x128xf32>
    %cst_6 = arith.constant dense<0.000000e+00> : vector<2x128xf32>
    %9 = vector.multi_reduction <add>, %8, %cst_6 [1] : vector<2x256x128xf32> to vector<2x128xf32>
    %cst_7 = arith.constant 3.906250e-03 : f32
    %10 = vector.broadcast %cst_7 : f32 to vector<2x128xf32>
    %11 = arith.mulf %9, %10 : vector<2x128xf32>
    %12 = arith.truncf %11 : vector<2x128xf32> to vector<2x128xbf16>
    %c0_8 = arith.constant 0 : index
    %c0_9 = arith.constant 0 : index
    %13 = vector.load %arg3[%c0_8, %c0_9] : memref<128x128xbf16, #tpu.memory_space<vmem>>, vector<128x128xbf16>
    %cst_10 = arith.constant dense<0.000000e+00> : vector<2x128xf32>
    %14 = tpu.matmul %12, %13, %cst_10 {dimension_numbers = #tpu.dot_dimension_numbers<[1], [0], [0], [1], [0, 0, 1, 1], [], []>} : vector<2x128xbf16>, vector<128x128xbf16>, vector<2x128xf32> -> vector<2x128xf32>
    %cst_11 = arith.constant dense<0.000000e+00> : vector<128xf32>
    %15 = vector.multi_reduction <add>, %14, %cst_11 [0] : vector<2x128xf32> to vector<128xf32>
    %16 = vector.shape_cast %15 : vector<128xf32> to vector<1x128xf32>
    %cst_12 = arith.constant 2.000000e+00 : f32
    %17 = vector.broadcast %cst_12 : f32 to vector<1x128xf32>
    %18 = arith.divf %16, %17 : vector<1x128xf32>
    %19 = vector.broadcast %18 : vector<1x128xf32> to vector<2x128xf32>
    %20 = arith.subf %14, %19 : vector<2x128xf32>
    %21 = arith.mulf %20, %20 : vector<2x128xf32>
    %cst_13 = arith.constant dense<0.000000e+00> : vector<128xf32>
    %22 = vector.multi_reduction <add>, %21, %cst_13 [0] : vector<2x128xf32> to vector<128xf32>
    %23 = vector.shape_cast %22 : vector<128xf32> to vector<1x128xf32>
    %cst_14 = arith.constant 2.000000e+00 : f32
    %24 = vector.broadcast %cst_14 : f32 to vector<1x128xf32>
    %25 = arith.divf %23, %24 : vector<1x128xf32>
    %26 = vector.broadcast %18 : vector<1x128xf32> to vector<2x128xf32>
    %27 = arith.subf %14, %26 : vector<2x128xf32>
    %cst_15 = arith.constant 9.99999974E-6 : f32
    %28 = vector.broadcast %cst_15 : f32 to vector<1x128xf32>
    %29 = arith.addf %25, %28 : vector<1x128xf32>
    %30 = math.rsqrt %29 : vector<1x128xf32>
    %31 = vector.broadcast %30 : vector<1x128xf32> to vector<2x128xf32>
    %32 = arith.mulf %27, %31 : vector<2x128xf32>
    %c0_16 = arith.constant 0 : index
    %c0_17 = arith.constant 0 : index
    %33 = vector.load %arg4[%c0_16, %c0_17] : memref<1x128xf32, #tpu.memory_space<vmem>>, vector<1x128xf32>
    %34 = vector.broadcast %33 : vector<1x128xf32> to vector<2x128xf32>
    %35 = arith.mulf %32, %34 : vector<2x128xf32>
    %c0_18 = arith.constant 0 : index
    %c0_19 = arith.constant 0 : index
    %36 = vector.load %arg5[%c0_18, %c0_19] : memref<1x128xf32, #tpu.memory_space<vmem>>, vector<1x128xf32>
    %37 = vector.broadcast %36 : vector<1x128xf32> to vector<2x128xf32>
    %38 = arith.addf %35, %37 : vector<2x128xf32>
    %cst_20 = arith.constant 0.000000e+00 : f32
    %39 = vector.broadcast %cst_20 : f32 to vector<2x128xf32>
    %40 = arith.cmpf oge, %38, %39 : vector<2x128xf32>
    %cst_21 = arith.constant 0.00999999977 : f32
    %41 = vector.broadcast %cst_21 : f32 to vector<2x128xf32>
    %42 = arith.mulf %41, %38 : vector<2x128xf32>
    %43 = arith.select %40, %38, %42 : vector<2x128xi1>, vector<2x128xf32>
    %44 = arith.truncf %43 : vector<2x128xf32> to vector<2x128xbf16>
    %c0_22 = arith.constant 0 : index
    %c0_23 = arith.constant 0 : index
    %45 = vector.load %arg6[%c0_22, %c0_23] : memref<128x128xbf16, #tpu.memory_space<vmem>>, vector<128x128xbf16>
    %cst_24 = arith.constant dense<0.000000e+00> : vector<2x128xf32>
    %46 = tpu.matmul %44, %45, %cst_24 {dimension_numbers = #tpu.dot_dimension_numbers<[1], [0], [0], [1], [0, 0, 1, 1], [], []>} : vector<2x128xbf16>, vector<128x128xbf16>, vector<2x128xf32> -> vector<2x128xf32>
    %c0_25 = arith.constant 0 : index
    %c0_26 = arith.constant 0 : index
    %47 = vector.load %arg7[%c0_25, %c0_26] : memref<1x128xf32, #tpu.memory_space<vmem>>, vector<1x128xf32>
    %48 = vector.broadcast %47 : vector<1x128xf32> to vector<2x128xf32>
    %49 = arith.addf %46, %48 : vector<2x128xf32>
    %c0_27 = arith.constant 0 : index
    %c0_28 = arith.constant 0 : index
    %50 = vector.load %arg8[%c0_27, %c0_28] : memref<2x128xf32, #tpu.memory_space<vmem>>, vector<2x128xf32>
    tpu.vector_store %arg8[%c0_27, %c0_28], %49 {strides = array<i32>} : memref<2x128xf32, #tpu.memory_space<vmem>>, vector<2x128xf32>,
    return
  }
}

</mosaic_0001>

<llo_original>
// kernel: tpu_custom_call.1
$region0: #{tpu_custom_call.1}
  #allocation0 [shape = 'u32[]', space=smem, size = 0x4, offset = 0x4, fixed_abs, tag = 'smem constant byte address 0x4 - core index']
  #allocation1 [shape = 'u32[144,128]{1,0:T(1,128)}', space=vmem, size = 0x12000, scoped, tag = 'internal scratch']
  %s0 = inlined_call_operand.hbm [shape: bf16[512,128], index: 0, kind: input, shape index: {}]
  %s1 = inlined_call_operand.hbm [shape: bf16[128,128], index: 1, kind: input, shape index: {}]
  %s2 = inlined_call_operand.vmem [shape: f32[1,128], index: 2, kind: input, shape index: {}]
  %s3 = inlined_call_operand.hbm [shape: bf16[128,128], index: 3, kind: input, shape index: {}]
  %s4 = inlined_call_operand.vmem [shape: f32[1,128], index: 4, kind: input, shape index: {}]
  %s5 = inlined_call_operand.vmem [shape: f32[1,128], index: 5, kind: input, shape index: {}]
  %s6 = inlined_call_operand.hbm [shape: bf16[128,128], index: 6, kind: input, shape index: {}]
  %s7 = inlined_call_operand.vmem [shape: f32[1,128], index: 7, kind: input, shape index: {}]
  %s8 = inlined_call_operand.hbm [shape: f32[2,128], index: 8, kind: output, shape index: {}]
  %s9 = sld [smem:[#allocation0]]
  $region58: #{tpu_custom_call.1} parent=0
    _
  %s11 = ssub.s32 1, %s9
  %s12 = scalar_select 0, %s11, %s9
  $region1: #{tpu_custom_call.1} parent=0
    #allocation2 [shape = 'u8[131072]{0}', space=vmem, size = 0x20000, scoped, tag = 'input window, operand 0, single buffered']
    #allocation3 [shape = 's32[1]{0}', space=sflag, size = 0x4, scoped, tag = 'scoped memory for tpu_custom_call.1']
    #allocation4 [shape = 's32[1]{0}', space=sflag, size = 0x4, scoped, tag = 'scoped memory for tpu_custom_call.1']
    #allocation5 [shape = 'u8[32768]{0}', space=vmem, size = 0x8000, scoped, tag = 'input window, operand 1, single buffered']
    #allocation6 [shape = 's32[1]{0}', space=sflag, size = 0x4, scoped, tag = 'scoped memory for tpu_custom_call.1']
    #allocation7 [shape = 'u8[32768]{0}', space=vmem, size = 0x8000, scoped, tag = 'input window, operand 3, single buffered']
    #allocation8 [shape = 'u8[32768]{0}', space=vmem, size = 0x8000, scoped, tag = 'input window, operand 6, single buffered']
    #allocation9 [shape = 's32[1]{0}', space=sflag, size = 0x4, scoped, tag = 'scoped memory for tpu_custom_call.1']
    #allocation10 [shape = 'u8[1024]{0}', space=vmem, size = 0x400, scoped, tag = 'output window, operand 0, single buffered']
    %13 = vsyncpa [#allocation3], 0
    %14 = vsyncpa [#allocation6], 0
    %15 = vsyncpa [#allocation9], 0
    %16 = vsyncpa [#allocation4], 0
    // Predicated region
    $region2: #{tpu_custom_call.1} parent=1 // pred_check
      _
    $region3: #{tpu_custom_call.1} parent=1 // pred_check_branch
      %18 = sbr.rel (0) target = $region5
    $region4: #{tpu_custom_call.1} parent=1 // pred_region
      %s20 = ssub.s32 4096, 4096
      %21 = vsyncadd [#allocation3], %s20
      %s22 = sshll.u32 [#allocation2], 4
      %s23 = int_to_ptr.vmem [resolvable:$true] %s22
      %28 = dma.hbm_to_vmem [thread:$0]  %s0, 4096, %s23, [#allocation3], 64, 64, 4
    $region5: #{tpu_custom_call.1} parent=1 // pred_fallthru
      _
    // Predicated region
    $region6: #{tpu_custom_call.1} parent=1 // pred_check
      _
    $region7: #{tpu_custom_call.1} parent=1 // pred_check_branch
      %30 = sbr.rel (0) target = $region9
    $region8: #{tpu_custom_call.1} parent=1 // pred_region
      %s32 = ssub.s32 1024, 1024
      %33 = vsyncadd [#allocation6], %s32
      %s34 = sshll.u32 [#allocation5], 4
      %s35 = int_to_ptr.vmem [resolvable:$true] %s34
      %40 = dma.hbm_to_vmem [thread:$0]  %s1, 1024, %s35, [#allocation6], 64, 64, 4
    $region9: #{tpu_custom_call.1} parent=1 // pred_fallthru
      _
    // Predicated region
    $region10: #{tpu_custom_call.1} parent=1 // pred_check
      _
    $region11: #{tpu_custom_call.1} parent=1 // pred_check_branch
      %42 = sbr.rel (0) target = $region13
    $region12: #{tpu_custom_call.1} parent=1 // pred_region
      _
    $region13: #{tpu_custom_call.1} parent=1 // pred_fallthru
      _
    // Predicated region
    $region14: #{tpu_custom_call.1} parent=1 // pred_check
      _
    $region15: #{tpu_custom_call.1} parent=1 // pred_check_branch
      %44 = sbr.rel (0) target = $region17
    $region16: #{tpu_custom_call.1} parent=1 // pred_region
      %s46 = ssub.s32 1024, 1024
      %47 = vsyncadd [#allocation6], %s46
      %s48 = sshll.u32 [#allocation7], 4
      %s49 = int_to_ptr.vmem [resolvable:$true] %s48
      %54 = dma.hbm_to_vmem [thread:$0]  %s3, 1024, %s49, [#allocation6], 64, 64, 4
    $region17: #{tpu_custom_call.1} parent=1 // pred_fallthru
      _
    // Predicated region
    $region18: #{tpu_custom_call.1} parent=1 // pred_check
      _
    $region19: #{tpu_custom_call.1} parent=1 // pred_check_branch
      %56 = sbr.rel (0) target = $region21
    $region20: #{tpu_custom_call.1} parent=1 // pred_region
      _
    $region21: #{tpu_custom_call.1} parent=1 // pred_fallthru
      _
    // Predicated region
    $region22: #{tpu_custom_call.1} parent=1 // pred_check
      _
    $region23: #{tpu_custom_call.1} parent=1 // pred_check_branch
      %58 = sbr.rel (0) target = $region25
    $region24: #{tpu_custom_call.1} parent=1 // pred_region
      _
    $region25: #{tpu_custom_call.1} parent=1 // pred_fallthru
      _
    // Predicated region
    $region26: #{tpu_custom_call.1} parent=1 // pred_check
      _
    $region27: #{tpu_custom_call.1} parent=1 // pred_check_branch
      %60 = sbr.rel (0) target = $region29
    $region28: #{tpu_custom_call.1} parent=1 // pred_region
      %s62 = ssub.s32 1024, 1024
      %63 = vsyncadd [#allocation9], %s62
      %s64 = sshll.u32 [#allocation8], 4
      %s65 = int_to_ptr.vmem [resolvable:$true] %s64
      %70 = dma.hbm_to_vmem [thread:$0]  %s6, 1024, %s65, [#allocation9], 64, 64, 4
    $region29: #{tpu_custom_call.1} parent=1 // pred_fallthru
      _
    // Predicated region
    $region30: #{tpu_custom_call.1} parent=1 // pred_check
      _
    $region31: #{tpu_custom_call.1} parent=1 // pred_check_branch
      %72 = sbr.rel (0) target = $region33
    $region32: #{tpu_custom_call.1} parent=1 // pred_region
      _
    $region33: #{tpu_custom_call.1} parent=1 // pred_fallthru
      _
    // Predicated region
    $region34: #{tpu_custom_call.1} parent=1 // pred_check
      _
    $region35: #{tpu_custom_call.1} parent=1 // pred_check_branch
      %74 = sbr.rel (0) target = $region37
    $region36: #{tpu_custom_call.1} parent=1 // pred_region
      %75 = dma.done [#allocation3], 4096
    $region37: #{tpu_custom_call.1} parent=1 // pred_fallthru
      _
    // Predicated region
    $region38: #{tpu_custom_call.1} parent=1 // pred_check
      _
    $region39: #{tpu_custom_call.1} parent=1 // pred_check_branch
      %77 = sbr.rel (0) target = $region41
    $region40: #{tpu_custom_call.1} parent=1 // pred_region
      %78 = dma.done [#allocation6], 1024
    $region41: #{tpu_custom_call.1} parent=1 // pred_fallthru
      _
    // Predicated region
    $region42: #{tpu_custom_call.1} parent=1 // pred_check
      _
    $region43: #{tpu_custom_call.1} parent=1 // pred_check_branch
      %80 = sbr.rel (0) target = $region45
    $region44: #{tpu_custom_call.1} parent=1 // pred_region
      %81 = dma.done [#allocation6], 1024
    $region45: #{tpu_custom_call.1} parent=1 // pred_fallthru
      _
    // Predicated region
    $region46: #{tpu_custom_call.1} parent=1 // pred_check
      _
    $region47: #{tpu_custom_call.1} parent=1 // pred_check_branch
      %83 = sbr.rel (0) target = $region49
    $region48: #{tpu_custom_call.1} parent=1 // pred_region
      %84 = dma.done [#allocation9], 1024
    $region49: #{tpu_custom_call.1} parent=1 // pred_fallthru
      _
    %v86 = vld [vmem:[#allocation2] sm:$0xf]
    %v87 = vld [vmem:[#allocation2 + $0x4] sm:$0xf]
    %v88 = vld [vmem:[#allocation2 + $0x8] sm:$0xf]
    %v89 = vld [vmem:[#allocation2 + $0xc] sm:$0xf]
    %v90 = vld [vmem:[#allocation2 + $0x10] sm:$0xf]
    %v91 = vld [vmem:[#allocation2 + $0x14] sm:$0xf]
    %v92 = vld [vmem:[#allocation2 + $0x18] sm:$0xf]
    %v93 = vld [vmem:[#allocation2 + $0x1c] sm:$0xf]
    %v94 = vld [vmem:[#allocation2 + $0x20] sm:$0xf]
    %v95 = vld [vmem:[#allocation2 + $0x24] sm:$0xf]
    %v96 = vld [vmem:[#allocation2 + $0x28] sm:$0xf]
    %v97 = vld [vmem:[#allocation2 + $0x2c] sm:$0xf]
    %v98 = vld [vmem:[#allocation2 + $0x30] sm:$0xf]
    %v99 = vld [vmem:[#allocation2 + $0x34] sm:$0xf]
    %v100 = vld [vmem:[#allocation2 + $0x38] sm:$0xf]
    %v101 = vld [vmem:[#allocation2 + $0x3c] sm:$0xf]
    %v102 = vld [vmem:[#allocation2 + $0x40] sm:$0xf]
    %v103 = vld [vmem:[#allocation2 + $0x44] sm:$0xf]
    %v104 = vld [vmem:[#allocation2 + $0x48] sm:$0xf]
    %v105 = vld [vmem:[#allocation2 + $0x4c] sm:$0xf]
    %v106 = vld [vmem:[#allocation2 + $0x50] sm:$0xf]
    %v107 = vld [vmem:[#allocation2 + $0x54] sm:$0xf]
    %v108 = vld [vmem:[#allocation2 + $0x58] sm:$0xf]
    %v109 = vld [vmem:[#allocation2 + $0x5c] sm:$0xf]
    %v110 = vld [vmem:[#allocation2 + $0x60] sm:$0xf]
    %v111 = vld [vmem:[#allocation2 + $0x64] sm:$0xf]
    %v112 = vld [vmem:[#allocation2 + $0x68] sm:$0xf]
    %v113 = vld [vmem:[#allocation2 + $0x6c] sm:$0xf]
    %v114 = vld [vmem:[#allocation2 + $0x70] sm:$0xf]
    %v115 = vld [vmem:[#allocation2 + $0x74] sm:$0xf]
    %v116 = vld [vmem:[#allocation2 + $0x78] sm:$0xf]
    %v117 = vld [vmem:[#allocation2 + $0x7c] sm:$0xf]
    %v118 = vld [vmem:[#allocation2 + $0x80] sm:$0xf]
    %v119 = vld [vmem:[#allocation2 + $0x84] sm:$0xf]
    %v120 = vld [vmem:[#allocation2 + $0x88] sm:$0xf]
    %v121 = vld [vmem:[#allocation2 + $0x8c] sm:$0xf]
    %v122 = vld [vmem:[#allocation2 + $0x90] sm:$0xf]
    %v123 = vld [vmem:[#allocation2 + $0x94] sm:$0xf]
    %v124 = vld [vmem:[#allocation2 + $0x98] sm:$0xf]
    %v125 = vld [vmem:[#allocation2 + $0x9c] sm:$0xf]
    %v126 = vld [vmem:[#allocation2 + $0xa0] sm:$0xf]
    %v127 = vld [vmem:[#allocation2 + $0xa4] sm:$0xf]
    %v128 = vld [vmem:[#allocation2 + $0xa8] sm:$0xf]
    %v129 = vld [vmem:[#allocation2 + $0xac] sm:$0xf]
    %v130 = vld [vmem:[#allocation2 + $0xb0] sm:$0xf]
    %v131 = vld [vmem:[#allocation2 + $0xb4] sm:$0xf]
    %v132 = vld [vmem:[#allocation2 + $0xb8] sm:$0xf]
    %v133 = vld [vmem:[#allocation2 + $0xbc] sm:$0xf]
    %v134 = vld [vmem:[#allocation2 + $0xc0] sm:$0xf]
    %v135 = vld [vmem:[#allocation2 + $0xc4] sm:$0xf]
    %v136 = vld [vmem:[#allocation2 + $0xc8] sm:$0xf]
    %v137 = vld [vmem:[#allocation2 + $0xcc] sm:$0xf]
    %v138 = vld [vmem:[#allocation2 + $0xd0] sm:$0xf]
    %v139 = vld [vmem:[#allocation2 + $0xd4] sm:$0xf]
    %v140 = vld [vmem:[#allocation2 + $0xd8] sm:$0xf]
    %v141 = vld [vmem:[#allocation2 + $0xdc] sm:$0xf]
    %v142 = vld [vmem:[#allocation2 + $0xe0] sm:$0xf]
    %v143 = vld [vmem:[#allocation2 + $0xe4] sm:$0xf]
    %v144 = vld [vmem:[#allocation2 + $0xe8] sm:$0xf]
    %v145 = vld [vmem:[#allocation2 + $0xec] sm:$0xf]
    %v146 = vld [vmem:[#allocation2 + $0xf0] sm:$0xf]
    %v147 = vld [vmem:[#allocation2 + $0xf4] sm:$0xf]
    %v148 = vld [vmem:[#allocation2 + $0xf8] sm:$0xf]
    %v149 = vld [vmem:[#allocation2 + $0xfc] sm:$0xf]
    %v150 = vld [vmem:[#allocation5] sm:$0xf]
    %v151 = vld [vmem:[#allocation5 + $0x4] sm:$0xf]
    %v152 = vld [vmem:[#allocation5 + $0x8] sm:$0xf]
    %v153 = vld [vmem:[#allocation5 + $0xc] sm:$0xf]
    %v154 = vld [vmem:[#allocation5 + $0x10] sm:$0xf]
    %v155 = vld [vmem:[#allocation5 + $0x14] sm:$0xf]
    %v156 = vld [vmem:[#allocation5 + $0x18] sm:$0xf]
    %v157 = vld [vmem:[#allocation5 + $0x1c] sm:$0xf]
    %v158 = vld [vmem:[#allocation5 + $0x20] sm:$0xf]
    %v159 = vld [vmem:[#allocation5 + $0x24] sm:$0xf]
    %v160 = vld [vmem:[#allocation5 + $0x28] sm:$0xf]
    %v161 = vld [vmem:[#allocation5 + $0x2c] sm:$0xf]
    %v162 = vld [vmem:[#allocation5 + $0x30] sm:$0xf]
    %v163 = vld [vmem:[#allocation5 + $0x34] sm:$0xf]
    %v164 = vld [vmem:[#allocation5 + $0x38] sm:$0xf]
    %v165 = vld [vmem:[#allocation5 + $0x3c] sm:$0xf]
    %v166 = vld [vmem:[%s2] sm:$0x1]
    %v168 = vlaneseq
    %v169 = vshrl.u32 %v168, 7
    %v170 = vsub.s32 0, %v169
    %v171 = vrot.slane %v166, %v170
    %v237 = vunpack.c.l.b16 %v86
    %v238 = vunpack.c.l.b16 %v87
    %v239 = vunpack.c.l.b16 %v88
    %v240 = vunpack.c.l.b16 %v89
    %v241 = vunpack.c.l.b16 %v90
    %v242 = vunpack.c.l.b16 %v91
    %v243 = vunpack.c.l.b16 %v92
    %v244 = vunpack.c.l.b16 %v93
    %v245 = vunpack.c.l.b16 %v94
    %v246 = vunpack.c.l.b16 %v95
    %v247 = vunpack.c.l.b16 %v96
    %v248 = vunpack.c.l.b16 %v97
    %v249 = vunpack.c.l.b16 %v98
    %v250 = vunpack.c.l.b16 %v99
    %v251 = vunpack.c.l.b16 %v100
    %v252 = vunpack.c.l.b16 %v101
    %v253 = vunpack.c.l.b16 %v102
    %v254 = vunpack.c.l.b16 %v103
    %v255 = vunpack.c.l.b16 %v104
    %v256 = vunpack.c.l.b16 %v105
    %v257 = vunpack.c.l.b16 %v106
    %v258 = vunpack.c.l.b16 %v107
    %v259 = vunpack.c.l.b16 %v108
    %v260 = vunpack.c.l.b16 %v109
    %v261 = vunpack.c.l.b16 %v110
    %v262 = vunpack.c.l.b16 %v111
    %v263 = vunpack.c.l.b16 %v112
    %v264 = vunpack.c.l.b16 %v113
    %v265 = vunpack.c.l.b16 %v114
    %v266 = vunpack.c.l.b16 %v115
    %v267 = vunpack.c.l.b16 %v116
    %v268 = vunpack.c.l.b16 %v117
    %v269 = vunpack.c.l.b16 %v118
    %v270 = vunpack.c.l.b16 %v119
    %v271 = vunpack.c.l.b16 %v120
    %v272 = vunpack.c.l.b16 %v121
    %v273 = vunpack.c.l.b16 %v122
    %v274 = vunpack.c.l.b16 %v123
    %v275 = vunpack.c.l.b16 %v124
    %v276 = vunpack.c.l.b16 %v125
    %v277 = vunpack.c.l.b16 %v126
    %v278 = vunpack.c.l.b16 %v127
    %v279 = vunpack.c.l.b16 %v128
    %v280 = vunpack.c.l.b16 %v129
    %v281 = vunpack.c.l.b16 %v130
    %v282 = vunpack.c.l.b16 %v131
    %v283 = vunpack.c.l.b16 %v132
    %v284 = vunpack.c.l.b16 %v133
    %v285 = vunpack.c.l.b16 %v134
    %v286 = vunpack.c.l.b16 %v135
    %v287 = vunpack.c.l.b16 %v136
    %v288 = vunpack.c.l.b16 %v137
    %v289 = vunpack.c.l.b16 %v138
    %v290 = vunpack.c.l.b16 %v139
    %v291 = vunpack.c.l.b16 %v140
    %v292 = vunpack.c.l.b16 %v141
    %v293 = vunpack.c.l.b16 %v142
    %v294 = vunpack.c.l.b16 %v143
    %v295 = vunpack.c.l.b16 %v144
    %v296 = vunpack.c.l.b16 %v145
    %v297 = vunpack.c.l.b16 %v146
    %v298 = vunpack.c.l.b16 %v147
    %v299 = vunpack.c.l.b16 %v148
    %v300 = vunpack.c.l.b16 %v149
    %v301 = vpack.c.b16 %v238, %v237
    %v302 = vpack.c.b16 %v240, %v239
    %v303 = vpack.c.b16 %v242, %v241
    %v304 = vpack.c.b16 %v244, %v243
    %v305 = vpack.c.b16 %v246, %v245
    %v306 = vpack.c.b16 %v248, %v247
    %v307 = vpack.c.b16 %v250, %v249
    %v308 = vpack.c.b16 %v252, %v251
    %v309 = vpack.c.b16 %v254, %v253
    %v310 = vpack.c.b16 %v256, %v255
    %v311 = vpack.c.b16 %v258, %v257
    %v312 = vpack.c.b16 %v260, %v259
    %v313 = vpack.c.b16 %v262, %v261
    %v314 = vpack.c.b16 %v264, %v263
    %v315 = vpack.c.b16 %v266, %v265
    %v316 = vpack.c.b16 %v268, %v267
    %v317 = vpack.c.b16 %v270, %v269
    %v318 = vpack.c.b16 %v272, %v271
    %v319 = vpack.c.b16 %v274, %v273
    %v320 = vpack.c.b16 %v276, %v275
    %v321 = vpack.c.b16 %v278, %v277
    %v322 = vpack.c.b16 %v280, %v279
    %v323 = vpack.c.b16 %v282, %v281
    %v324 = vpack.c.b16 %v284, %v283
    %v325 = vpack.c.b16 %v286, %v285
    %v326 = vpack.c.b16 %v288, %v287
    %v327 = vpack.c.b16 %v290, %v289
    %v328 = vpack.c.b16 %v292, %v291
    %v329 = vpack.c.b16 %v294, %v293
    %v330 = vpack.c.b16 %v296, %v295
    %v331 = vpack.c.b16 %v298, %v297
    %v332 = vpack.c.b16 %v300, %v299
    %v381 = vunpack.c.l.b16 %v150
    %v382 = vunpack.c.l.b16 %v151
    %v383 = vunpack.c.l.b16 %v152
    %v384 = vunpack.c.l.b16 %v153
    %v385 = vunpack.c.l.b16 %v154
    %v386 = vunpack.c.l.b16 %v155
    %v387 = vunpack.c.l.b16 %v156
    %v388 = vunpack.c.l.b16 %v157
    %v389 = vunpack.c.l.b16 %v158
    %v390 = vunpack.c.l.b16 %v159
    %v391 = vunpack.c.l.b16 %v160
    %v392 = vunpack.c.l.b16 %v161
    %v393 = vunpack.c.l.b16 %v162
    %v394 = vunpack.c.l.b16 %v163
    %v395 = vunpack.c.l.b16 %v164
    %v396 = vunpack.c.l.b16 %v165
    %v397 = vpack.c.b16 %v382, %v381
    %v398 = vpack.c.b16 %v384, %v383
    %v399 = vpack.c.b16 %v386, %v385
    %v400 = vpack.c.b16 %v388, %v387
    %v401 = vpack.c.b16 %v390, %v389
    %v402 = vpack.c.b16 %v392, %v391
    %v403 = vpack.c.b16 %v394, %v393
    %v404 = vpack.c.b16 %v396, %v395
    %413 = vmatprep.subr.bf16.mxu0 0
    %414 = vmatpush1.bf16.msra.mxu0 %v397
    %415 = vmatprep.subr.bf16.mxu0 0
    %416 = vmatpush1.bf16.msra.mxu0 %v398
    %417 = vmatprep.subr.bf16.mxu0 0
    %418 = vmatpush1.bf16.msra.mxu0 %v399
    %419 = vmatprep.subr.bf16.mxu0 0
    %420 = vmatpush1.bf16.msra.mxu0 %v400
    %421 = vmatprep.subr.bf16.mxu0 0
    %422 = vmatpush1.bf16.msra.mxu0 %v401
    %423 = vmatprep.subr.bf16.mxu0 0
    %424 = vmatpush1.bf16.msra.mxu0 %v402
    %425 = vmatprep.subr.bf16.mxu0 0
    %426 = vmatpush1.bf16.msra.mxu0 %v403
    %427 = vmatprep.subr.bf16.mxu0 0
    %428 = vmatpush1.bf16.msra.mxu0 %v404
    %429 = vmatprep.subr.bf16.mxu0 0
    %430 = vmatpush1.bf16.msra.mxu0 0
    %431 = vmatprep.subr.bf16.mxu0 0
    %432 = vmatpush1.bf16.msra.mxu0 0
    %433 = vmatprep.subr.bf16.mxu0 0
    %434 = vmatpush1.bf16.msra.mxu0 0
    %435 = vmatprep.subr.bf16.mxu0 0
    %436 = vmatpush1.bf16.msra.mxu0 0
    %437 = vmatprep.subr.bf16.mxu0 0
    %438 = vmatpush1.bf16.msra.mxu0 0
    %439 = vmatprep.subr.bf16.mxu0 0
    %440 = vmatpush1.bf16.msra.mxu0 0
    %441 = vmatprep.subr.bf16.mxu0 0
    %442 = vmatpush1.bf16.msra.mxu0 0
    %443 = vmatprep.subr.bf16.mxu0 0
    %444 = vmatpush1.bf16.msra.mxu0 0
    %445 = vmatprep.mubr.bf16.mxu0 0
    %446 = vmatmul.mubr.bf16.gmra.mrb[0].mxu0 %v301
    %v447 = vpop.f32.mrb[0].mxu0
    %v448 = vadd.f32 %v171, %v447
    %v449 = vpop.f32.mrb[0].mxu0
    %v450 = vpop.f32.mrb[0].mxu0
    %v451 = vadd.f32 %v171, %v450
    %v452 = vpop.f32.mrb[0].mxu0
    %453 = vmatprep.mubr.bf16.mxu0 0
    %454 = vmatmul.mubr.bf16.gmra.mrb[0].mxu0 %v302
    %v455 = vpop.f32.mrb[0].mxu0
    %v456 = vadd.f32 %v171, %v455
    %v457 = vpop.f32.mrb[0].mxu0
    %v458 = vpop.f32.mrb[0].mxu0
    %v459 = vadd.f32 %v171, %v458
    %v460 = vpop.f32.mrb[0].mxu0
    %461 = vmatprep.mubr.bf16.mxu0 0
    %462 = vmatmul.mubr.bf16.gmra.mrb[0].mxu0 %v303
    %v463 = vpop.f32.mrb[0].mxu0
    %v464 = vadd.f32 %v171, %v463
    %v465 = vpop.f32.mrb[0].mxu0
    %v466 = vpop.f32.mrb[0].mxu0
    %v467 = vadd.f32 %v171, %v466
    %v468 = vpop.f32.mrb[0].mxu0
    %469 = vmatprep.mubr.bf16.mxu0 0
    %470 = vmatmul.mubr.bf16.gmra.mrb[0].mxu0 %v304
    %v471 = vpop.f32.mrb[0].mxu0
    %v472 = vadd.f32 %v171, %v471
    %v473 = vpop.f32.mrb[0].mxu0
    %v474 = vpop.f32.mrb[0].mxu0
    %v475 = vadd.f32 %v171, %v474
    %v476 = vpop.f32.mrb[0].mxu0
    %477 = vmatprep.mubr.bf16.mxu0 0
    %478 = vmatmul.mubr.bf16.gmra.mrb[0].mxu0 %v305
    %v479 = vpop.f32.mrb[0].mxu0
    %v480 = vadd.f32 %v171, %v479
    %v481 = vpop.f32.mrb[0].mxu0
    %v482 = vpop.f32.mrb[0].mxu0
    %v483 = vadd.f32 %v171, %v482
    %v484 = vpop.f32.mrb[0].mxu0
    %485 = vmatprep.mubr.bf16.mxu0 0
    %486 = vmatmul.mubr.bf16.gmra.mrb[0].mxu0 %v306
    %v487 = vpop.f32.mrb[0].mxu0
    %v488 = vadd.f32 %v171, %v487
    %v489 = vpop.f32.mrb[0].mxu0
    %v490 = vpop.f32.mrb[0].mxu0
    %v491 = vadd.f32 %v171, %v490
    %v492 = vpop.f32.mrb[0].mxu0
    %493 = vmatprep.mubr.bf16.mxu0 0
    %494 = vmatmul.mubr.bf16.gmra.mrb[0].mxu0 %v307
    %v495 = vpop.f32.mrb[0].mxu0
    %v496 = vadd.f32 %v171, %v495
    %v497 = vpop.f32.mrb[0].mxu0
    %v498 = vpop.f32.mrb[0].mxu0
    %v499 = vadd.f32 %v171, %v498
    %v500 = vpop.f32.mrb[0].mxu0
    %501 = vmatprep.mubr.bf16.mxu0 0
    %502 = vmatmul.mubr.bf16.gmra.mrb[0].mxu0 %v308
    %v503 = vpop.f32.mrb[0].mxu0
    %v504 = vadd.f32 %v171, %v503
    %v505 = vpop.f32.mrb[0].mxu0
    %v506 = vpop.f32.mrb[0].mxu0
    %v507 = vadd.f32 %v171, %v506
    %v508 = vpop.f32.mrb[0].mxu0
    %509 = vmatprep.mubr.bf16.mxu0 0
    %510 = vmatmul.mubr.bf16.gmra.mrb[0].mxu0 %v309
    %v511 = vpop.f32.mrb[0].mxu0
    %v512 = vadd.f32 %v171, %v511
    %v513 = vpop.f32.mrb[0].mxu0
    %v514 = vpop.f32.mrb[0].mxu0
    %v515 = vadd.f32 %v171, %v514
    %v516 = vpop.f32.mrb[0].mxu0
    %517 = vmatprep.mubr.bf16.mxu0 0
    %518 = vmatmul.mubr.bf16.gmra.mrb[0].mxu0 %v310
    %v519 = vpop.f32.mrb[0].mxu0
    %v520 = vadd.f32 %v171, %v519
    %v521 = vpop.f32.mrb[0].mxu0
    %v522 = vpop.f32.mrb[0].mxu0
    %v523 = vadd.f32 %v171, %v522
    %v524 = vpop.f32.mrb[0].mxu0
    %525 = vmatprep.mubr.bf16.mxu0 0
    %526 = vmatmul.mubr.bf16.gmra.mrb[0].mxu0 %v311
    %v527 = vpop.f32.mrb[0].mxu0
    %v528 = vadd.f32 %v171, %v527
    %v529 = vpop.f32.mrb[0].mxu0
    %v530 = vpop.f32.mrb[0].mxu0
    %v531 = vadd.f32 %v171, %v530
    %v532 = vpop.f32.mrb[0].mxu0
    %533 = vmatprep.mubr.bf16.mxu0 0
    %534 = vmatmul.mubr.bf16.gmra.mrb[0].mxu0 %v312
    %v535 = vpop.f32.mrb[0].mxu0
    %v536 = vadd.f32 %v171, %v535
    %v537 = vpop.f32.mrb[0].mxu0
    %v538 = vpop.f32.mrb[0].mxu0
    %v539 = vadd.f32 %v171, %v538
    %v540 = vpop.f32.mrb[0].mxu0
    %541 = vmatprep.mubr.bf16.mxu0 0
    %542 = vmatmul.mubr.bf16.gmra.mrb[0].mxu0 %v313
    %v543 = vpop.f32.mrb[0].mxu0
    %v544 = vadd.f32 %v171, %v543
    %v545 = vpop.f32.mrb[0].mxu0
    %v546 = vpop.f32.mrb[0].mxu0
    %v547 = vadd.f32 %v171, %v546
    %v548 = vpop.f32.mrb[0].mxu0
    %549 = vmatprep.mubr.bf16.mxu0 0
    %550 = vmatmul.mubr.bf16.gmra.mrb[0].mxu0 %v314
    %v551 = vpop.f32.mrb[0].mxu0
    %v552 = vadd.f32 %v171, %v551
    %v553 = vpop.f32.mrb[0].mxu0
    %v554 = vpop.f32.mrb[0].mxu0
    %v555 = vadd.f32 %v171, %v554
    %v556 = vpop.f32.mrb[0].mxu0
    %557 = vmatprep.mubr.bf16.mxu0 0
    %558 = vmatmul.mubr.bf16.gmra.mrb[0].mxu0 %v315
    %v559 = vpop.f32.mrb[0].mxu0
    %v560 = vadd.f32 %v171, %v559
    %v561 = vpop.f32.mrb[0].mxu0
    %v562 = vpop.f32.mrb[0].mxu0
    %v563 = vadd.f32 %v171, %v562
    %v564 = vpop.f32.mrb[0].mxu0
    %565 = vmatprep.mubr.bf16.mxu0 0
    %566 = vmatmul.mubr.bf16.gmra.mrb[0].mxu0 %v316
    %v567 = vpop.f32.mrb[0].mxu0
    %v568 = vadd.f32 %v171, %v567
    %v569 = vpop.f32.mrb[0].mxu0
    %v570 = vpop.f32.mrb[0].mxu0
    %v571 = vadd.f32 %v171, %v570
    %v572 = vpop.f32.mrb[0].mxu0
    %573 = vmatprep.mubr.bf16.mxu0 0
    %574 = vmatmul.mubr.bf16.gmra.mrb[0].mxu0 %v317
    %v575 = vpop.f32.mrb[0].mxu0
    %v576 = vadd.f32 %v171, %v575
    %v577 = vpop.f32.mrb[0].mxu0
    %v578 = vpop.f32.mrb[0].mxu0
    %v579 = vadd.f32 %v171, %v578
    %v580 = vpop.f32.mrb[0].mxu0
    %581 = vmatprep.mubr.bf16.mxu0 0
    %582 = vmatmul.mubr.bf16.gmra.mrb[0].mxu0 %v318
    %v583 = vpop.f32.mrb[0].mxu0
    %v584 = vadd.f32 %v171, %v583
    %v585 = vpop.f32.mrb[0].mxu0
    %v586 = vpop.f32.mrb[0].mxu0
    %v587 = vadd.f32 %v171, %v586
    %v588 = vpop.f32.mrb[0].mxu0
    %589 = vmatprep.mubr.bf16.mxu0 0
    %590 = vmatmul.mubr.bf16.gmra.mrb[0].mxu0 %v319
    %v591 = vpop.f32.mrb[0].mxu0
    %v592 = vadd.f32 %v171, %v591
    %v593 = vpop.f32.mrb[0].mxu0
    %v594 = vpop.f32.mrb[0].mxu0
    %v595 = vadd.f32 %v171, %v594
    %v596 = vpop.f32.mrb[0].mxu0
    %597 = vmatprep.mubr.bf16.mxu0 0
    %598 = vmatmul.mubr.bf16.gmra.mrb[0].mxu0 %v320
    %v599 = vpop.f32.mrb[0].mxu0
    %v600 = vadd.f32 %v171, %v599
    %v601 = vpop.f32.mrb[0].mxu0
    %v602 = vpop.f32.mrb[0].mxu0
    %v603 = vadd.f32 %v171, %v602
    %v604 = vpop.f32.mrb[0].mxu0
    %605 = vmatprep.mubr.bf16.mxu0 0
    %606 = vmatmul.mubr.bf16.gmra.mrb[0].mxu0 %v321
    %v607 = vpop.f32.mrb[0].mxu0
    %v608 = vadd.f32 %v171, %v607
    %v609 = vpop.f32.mrb[0].mxu0
    %v610 = vpop.f32.mrb[0].mxu0
    %v611 = vadd.f32 %v171, %v610
    %v612 = vpop.f32.mrb[0].mxu0
    %613 = vmatprep.mubr.bf16.mxu0 0
    %614 = vmatmul.mubr.bf16.gmra.mrb[0].mxu0 %v322
    %v615 = vpop.f32.mrb[0].mxu0
    %v616 = vadd.f32 %v171, %v615
    %v617 = vpop.f32.mrb[0].mxu0
    %v618 = vpop.f32.mrb[0].mxu0
    %v619 = vadd.f32 %v171, %v618
    %v620 = vpop.f32.mrb[0].mxu0
    %621 = vmatprep.mubr.bf16.mxu0 0
    %622 = vmatmul.mubr.bf16.gmra.mrb[0].mxu0 %v323
    %v623 = vpop.f32.mrb[0].mxu0
    %v624 = vadd.f32 %v171, %v623
    %v625 = vpop.f32.mrb[0].mxu0
    %v626 = vpop.f32.mrb[0].mxu0
    %v627 = vadd.f32 %v171, %v626
    %v628 = vpop.f32.mrb[0].mxu0
    %629 = vmatprep.mubr.bf16.mxu0 0
    %630 = vmatmul.mubr.bf16.gmra.mrb[0].mxu0 %v324
    %v631 = vpop.f32.mrb[0].mxu0
    %v632 = vadd.f32 %v171, %v631
    %v633 = vpop.f32.mrb[0].mxu0
    %v634 = vpop.f32.mrb[0].mxu0
    %v635 = vadd.f32 %v171, %v634
    %v636 = vpop.f32.mrb[0].mxu0
    %637 = vmatprep.mubr.bf16.mxu0 0
    %638 = vmatmul.mubr.bf16.gmra.mrb[0].mxu0 %v325
    %v639 = vpop.f32.mrb[0].mxu0
    %v640 = vadd.f32 %v171, %v639
    %v641 = vpop.f32.mrb[0].mxu0
    %v642 = vpop.f32.mrb[0].mxu0
    %v643 = vadd.f32 %v171, %v642
    %v644 = vpop.f32.mrb[0].mxu0
    %645 = vmatprep.mubr.bf16.mxu0 0
    %646 = vmatmul.mubr.bf16.gmra.mrb[0].mxu0 %v326
    %v647 = vpop.f32.mrb[0].mxu0
    %v648 = vadd.f32 %v171, %v647
    %v649 = vpop.f32.mrb[0].mxu0
    %v650 = vpop.f32.mrb[0].mxu0
    %v651 = vadd.f32 %v171, %v650
    %v652 = vpop.f32.mrb[0].mxu0
    %653 = vmatprep.mubr.bf16.mxu0 0
    %654 = vmatmul.mubr.bf16.gmra.mrb[0].mxu0 %v327
    %v655 = vpop.f32.mrb[0].mxu0
    %v656 = vadd.f32 %v171, %v655
    %v657 = vpop.f32.mrb[0].mxu0
    %v658 = vpop.f32.mrb[0].mxu0
    %v659 = vadd.f32 %v171, %v658
    %v660 = vpop.f32.mrb[0].mxu0
    %661 = vmatprep.mubr.bf16.mxu0 0
    %662 = vmatmul.mubr.bf16.gmra.mrb[0].mxu0 %v328
    %v663 = vpop.f32.mrb[0].mxu0
    %v664 = vadd.f32 %v171, %v663
    %v665 = vpop.f32.mrb[0].mxu0
    %v666 = vpop.f32.mrb[0].mxu0
    %v667 = vadd.f32 %v171, %v666
    %v668 = vpop.f32.mrb[0].mxu0
    %669 = vmatprep.mubr.bf16.mxu0 0
    %670 = vmatmul.mubr.bf16.gmra.mrb[0].mxu0 %v329
    %v671 = vpop.f32.mrb[0].mxu0
    %v672 = vadd.f32 %v171, %v671
    %v673 = vpop.f32.mrb[0].mxu0
    %v674 = vpop.f32.mrb[0].mxu0
    %v675 = vadd.f32 %v171, %v674
    %v676 = vpop.f32.mrb[0].mxu0
    %677 = vmatprep.mubr.bf16.mxu0 0
    %678 = vmatmul.mubr.bf16.gmra.mrb[0].mxu0 %v330
    %v679 = vpop.f32.mrb[0].mxu0
    %v680 = vadd.f32 %v171, %v679
    %v681 = vpop.f32.mrb[0].mxu0
    %v682 = vpop.f32.mrb[0].mxu0
    %v683 = vadd.f32 %v171, %v682
    %v684 = vpop.f32.mrb[0].mxu0
    %685 = vmatprep.mubr.bf16.mxu0 0
    %686 = vmatmul.mubr.bf16.gmra.mrb[0].mxu0 %v331
    %v687 = vpop.f32.mrb[0].mxu0
    %v688 = vadd.f32 %v171, %v687
    %v689 = vpop.f32.mrb[0].mxu0
    %v690 = vpop.f32.mrb[0].mxu0
    %v691 = vadd.f32 %v171, %v690
    %v692 = vpop.f32.mrb[0].mxu0
    %693 = vmatprep.mubr.bf16.mxu0 0
    %694 = vmatmul.mubr.bf16.gmra.mrb[0].mxu0 %v332
    %v695 = vpop.f32.mrb[0].mxu0
    %v696 = vadd.f32 %v171, %v695
    %v697 = vpop.f32.mrb[0].mxu0
    %v698 = vpop.f32.mrb[0].mxu0
    %v699 = vadd.f32 %v171, %v698
    %v700 = vpop.f32.mrb[0].mxu0
    %701 = vdwg.mxu0
    %v702 = vmax.f32 %v448, 0.0
    %v703 = vmax.f32 %v451, 0.0
    %v704 = vmax.f32 %v456, 0.0
    %v705 = vmax.f32 %v459, 0.0
    %v706 = vmax.f32 %v464, 0.0
    %v707 = vmax.f32 %v467, 0.0
    %v708 = vmax.f32 %v472, 0.0
    %v709 = vmax.f32 %v475, 0.0
    %v710 = vmax.f32 %v480, 0.0
    %v711 = vmax.f32 %v483, 0.0
    %v712 = vmax.f32 %v488, 0.0
    %v713 = vmax.f32 %v491, 0.0
    %v714 = vmax.f32 %v496, 0.0
    %v715 = vmax.f32 %v499, 0.0
    %v716 = vmax.f32 %v504, 0.0
    %v717 = vmax.f32 %v507, 0.0
    %v718 = vmax.f32 %v512, 0.0
    %v719 = vmax.f32 %v515, 0.0
    %v720 = vmax.f32 %v520, 0.0
    %v721 = vmax.f32 %v523, 0.0
    %v722 = vmax.f32 %v528, 0.0
    %v723 = vmax.f32 %v531, 0.0
    %v724 = vmax.f32 %v536, 0.0
    %v725 = vmax.f32 %v539, 0.0
    %v726 = vmax.f32 %v544, 0.0
    %v727 = vmax.f32 %v547, 0.0
    %v728 = vmax.f32 %v552, 0.0
    %v729 = vmax.f32 %v555, 0.0
    %v730 = vmax.f32 %v560, 0.0
    %v731 = vmax.f32 %v563, 0.0
    %v732 = vmax.f32 %v568, 0.0
    %v733 = vmax.f32 %v571, 0.0
    %v734 = vmax.f32 %v576, 0.0
    %v735 = vmax.f32 %v579, 0.0
    %v736 = vmax.f32 %v584, 0.0
    %v737 = vmax.f32 %v587, 0.0
    %v738 = vmax.f32 %v592, 0.0
    %v739 = vmax.f32 %v595, 0.0
    %v740 = vmax.f32 %v600, 0.0
    %v741 = vmax.f32 %v603, 0.0
    %v742 = vmax.f32 %v608, 0.0
    %v743 = vmax.f32 %v611, 0.0
    %v744 = vmax.f32 %v616, 0.0
    %v745 = vmax.f32 %v619, 0.0
    %v746 = vmax.f32 %v624, 0.0
    %v747 = vmax.f32 %v627, 0.0
    %v748 = vmax.f32 %v632, 0.0
    %v749 = vmax.f32 %v635, 0.0
    %v750 = vmax.f32 %v640, 0.0
    %v751 = vmax.f32 %v643, 0.0
    %v752 = vmax.f32 %v648, 0.0
    %v753 = vmax.f32 %v651, 0.0
    %v754 = vmax.f32 %v656, 0.0
    %v755 = vmax.f32 %v659, 0.0
    %v756 = vmax.f32 %v664, 0.0
    %v757 = vmax.f32 %v667, 0.0
    %v758 = vmax.f32 %v672, 0.0
    %v759 = vmax.f32 %v675, 0.0
    %v760 = vmax.f32 %v680, 0.0
    %v761 = vmax.f32 %v683, 0.0
    %v762 = vmax.f32 %v688, 0.0
    %v763 = vmax.f32 %v691, 0.0
    %v764 = vmax.f32 %v696, 0.0
    %v765 = vmax.f32 %v699, 0.0
    %v766 = vadd.f32 %v702, %v703
    %v767 = vadd.f32 %v766, %v704
    %v768 = vadd.f32 %v767, %v705
    %v769 = vadd.f32 %v768, %v706
    %v770 = vadd.f32 %v769, %v707
    %v771 = vadd.f32 %v770, %v708
    %v772 = vadd.f32 %v771, %v709
    %v773 = vadd.f32 %v772, %v710
    %v774 = vadd.f32 %v773, %v711
    %v775 = vadd.f32 %v774, %v712
    %v776 = vadd.f32 %v775, %v713
    %v777 = vadd.f32 %v776, %v714
    %v778 = vadd.f32 %v777, %v715
    %v779 = vadd.f32 %v778, %v716
    %v780 = vadd.f32 %v779, %v717
    %v781 = vadd.f32 %v780, %v718
    %v782 = vadd.f32 %v781, %v719
    %v783 = vadd.f32 %v782, %v720
    %v784 = vadd.f32 %v783, %v721
    %v785 = vadd.f32 %v784, %v722
    %v786 = vadd.f32 %v785, %v723
    %v787 = vadd.f32 %v786, %v724
    %v788 = vadd.f32 %v787, %v725
    %v789 = vadd.f32 %v788, %v726
    %v790 = vadd.f32 %v789, %v727
    %v791 = vadd.f32 %v790, %v728
    %v792 = vadd.f32 %v791, %v729
    %v793 = vadd.f32 %v792, %v730
    %v794 = vadd.f32 %v793, %v731
    %v795 = vadd.f32 %v794, %v732
    %v796 = vadd.f32 %v795, %v733
    %v797 = vrot.slane %v796, 4
    %v798 = vadd.f32 %v796, %v797
    %v799 = vrot.slane %v798, 2
    %v800 = vadd.f32 %v798, %v799
    %v801 = vrot.slane %v800, 1
    %v802 = vadd.f32 %v800, %v801
    %v803 = vadd.f32 %v734, %v735
    %v804 = vadd.f32 %v803, %v736
    %v805 = vadd.f32 %v804, %v737
    %v806 = vadd.f32 %v805, %v738
    %v807 = vadd.f32 %v806, %v739
    %v808 = vadd.f32 %v807, %v740
    %v809 = vadd.f32 %v808, %v741
    %v810 = vadd.f32 %v809, %v742
    %v811 = vadd.f32 %v810, %v743
    %v812 = vadd.f32 %v811, %v744
    %v813 = vadd.f32 %v812, %v745
    %v814 = vadd.f32 %v813, %v746
    %v815 = vadd.f32 %v814, %v747
    %v816 = vadd.f32 %v815, %v748
    %v817 = vadd.f32 %v816, %v749
    %v818 = vadd.f32 %v817, %v750
    %v819 = vadd.f32 %v818, %v751
    %v820 = vadd.f32 %v819, %v752
    %v821 = vadd.f32 %v820, %v753
    %v822 = vadd.f32 %v821, %v754
    %v823 = vadd.f32 %v822, %v755
    %v824 = vadd.f32 %v823, %v756
    %v825 = vadd.f32 %v824, %v757
    %v826 = vadd.f32 %v825, %v758
    %v827 = vadd.f32 %v826, %v759
    %v828 = vadd.f32 %v827, %v760
    %v829 = vadd.f32 %v828, %v761
    %v830 = vadd.f32 %v829, %v762
    %v831 = vadd.f32 %v830, %v763
    %v832 = vadd.f32 %v831, %v764
    %v833 = vadd.f32 %v832, %v765
    %v834 = vrot.slane %v833, 4
    %v835 = vadd.f32 %v833, %v834
    %v836 = vrot.slane %v835, 2
    %v837 = vadd.f32 %v835, %v836
    %v838 = vrot.slane %v837, 1
    %v839 = vadd.f32 %v837, %v838
    %v840 = vmul.f32 %v802, 0.00390625
    %v841 = vmul.f32 %v839, 0.00390625
    %v842 = vpack.c.bf16 %v840, %v840
    %v843 = vpack.c.bf16 %v841, %v841
    %v844 = vld [vmem:[#allocation7] sm:$0xf]
    %v845 = vld [vmem:[#allocation7 + $0x4] sm:$0xf]
    %v846 = vld [vmem:[#allocation7 + $0x8] sm:$0xf]
    %v847 = vld [vmem:[#allocation7 + $0xc] sm:$0xf]
    %v848 = vld [vmem:[#allocation7 + $0x10] sm:$0xf]
    %v849 = vld [vmem:[#allocation7 + $0x14] sm:$0xf]
    %v850 = vld [vmem:[#allocation7 + $0x18] sm:$0xf]
    %v851 = vld [vmem:[#allocation7 + $0x1c] sm:$0xf]
    %v852 = vld [vmem:[#allocation7 + $0x20] sm:$0xf]
    %v853 = vld [vmem:[#allocation7 + $0x24] sm:$0xf]
    %v854 = vld [vmem:[#allocation7 + $0x28] sm:$0xf]
    %v855 = vld [vmem:[#allocation7 + $0x2c] sm:$0xf]
    %v856 = vld [vmem:[#allocation7 + $0x30] sm:$0xf]
    %v857 = vld [vmem:[#allocation7 + $0x34] sm:$0xf]
    %v858 = vld [vmem:[#allocation7 + $0x38] sm:$0xf]
    %v859 = vld [vmem:[#allocation7 + $0x3c] sm:$0xf]
    %v862 = vunpack.c.l.b16 %v842
    %v863 = vunpack.c.l.b16 %v843
    %vm864 = vcmask 1041409
    %v865 = vsel %vm864, %v863, %v862
    %v866 = vpack.c.b16 %v865, %v865
    %v884 = vunpack.c.l.b16 %v844
    %v885 = vunpack.c.l.b16 %v845
    %v886 = vunpack.c.l.b16 %v846
    %v887 = vunpack.c.l.b16 %v847
    %v888 = vunpack.c.l.b16 %v848
    %v889 = vunpack.c.l.b16 %v849
    %v890 = vunpack.c.l.b16 %v850
    %v891 = vunpack.c.l.b16 %v851
    %v892 = vunpack.c.l.b16 %v852
    %v893 = vunpack.c.l.b16 %v853
    %v894 = vunpack.c.l.b16 %v854
    %v895 = vunpack.c.l.b16 %v855
    %v896 = vunpack.c.l.b16 %v856
    %v897 = vunpack.c.l.b16 %v857
    %v898 = vunpack.c.l.b16 %v858
    %v899 = vunpack.c.l.b16 %v859
    %v900 = vpack.c.b16 %v885, %v884
    %v901 = vpack.c.b16 %v887, %v886
    %v902 = vpack.c.b16 %v889, %v888
    %v903 = vpack.c.b16 %v891, %v890
    %v904 = vpack.c.b16 %v893, %v892
    %v905 = vpack.c.b16 %v895, %v894
    %v906 = vpack.c.b16 %v897, %v896
    %v907 = vpack.c.b16 %v899, %v898
    %916 = vmatprep.subr.bf16.mxu0 0
    %917 = vmatpush1.bf16.msra.mxu0 %v900
    %918 = vmatprep.subr.bf16.mxu0 0
    %919 = vmatpush1.bf16.msra.mxu0 %v901
    %920 = vmatprep.subr.bf16.mxu0 0
    %921 = vmatpush1.bf16.msra.mxu0 %v902
    %922 = vmatprep.subr.bf16.mxu0 0
    %923 = vmatpush1.bf16.msra.mxu0 %v903
    %924 = vmatprep.subr.bf16.mxu0 0
    %925 = vmatpush1.bf16.msra.mxu0 %v904
    %926 = vmatprep.subr.bf16.mxu0 0
    %927 = vmatpush1.bf16.msra.mxu0 %v905
    %928 = vmatprep.subr.bf16.mxu0 0
    %929 = vmatpush1.bf16.msra.mxu0 %v906
    %930 = vmatprep.subr.bf16.mxu0 0
    %931 = vmatpush1.bf16.msra.mxu0 %v907
    %932 = vmatprep.subr.bf16.mxu0 0
    %933 = vmatpush1.bf16.msra.mxu0 0
    %934 = vmatprep.subr.bf16.mxu0 0
    %935 = vmatpush1.bf16.msra.mxu0 0
    %936 = vmatprep.subr.bf16.mxu0 0
    %937 = vmatpush1.bf16.msra.mxu0 0
    %938 = vmatprep.subr.bf16.mxu0 0
    %939 = vmatpush1.bf16.msra.mxu0 0
    %940 = vmatprep.subr.bf16.mxu0 0
    %941 = vmatpush1.bf16.msra.mxu0 0
    %942 = vmatprep.subr.bf16.mxu0 0
    %943 = vmatpush1.bf16.msra.mxu0 0
    %944 = vmatprep.subr.bf16.mxu0 0
    %945 = vmatpush1.bf16.msra.mxu0 0
    %946 = vmatprep.subr.bf16.mxu0 0
    %947 = vmatpush1.bf16.msra.mxu0 0
    %948 = vmatprep.mubr.bf16.mxu0 0
    %949 = vmatmul.mubr.bf16.gmra.mrb[0].mxu0 %v866
    %v950 = vpop.f32.mrb[0].mxu0
    %v951 = vadd.f32 0.0, %v950
    %v952 = vpop.f32.mrb[0].mxu0
    %v953 = vpop.f32.mrb[0].mxu0
    %v954 = vpop.f32.mrb[0].mxu0
    %955 = vdwg.mxu0
    %vm956 = vcmask 1041408
    %v957 = vsel %vm956, %v951, 0.0
    %v958 = vrot.slane %v957, 4
    %v959 = vadd.f32 %v957, %v958
    %v960 = vrot.slane %v959, 2
    %v961 = vadd.f32 %v959, %v960
    %v962 = vrot.slane %v961, 1
    %v963 = vadd.f32 %v961, %v962
    %v964 = vrcp.pop 2.0
    %v965 = vmul.f32 %v963, %v964
    %v966 = vsub.f32 %v951, %v965
    %v967 = vmul.f32 %v966, %v966
    %v968 = vsel %vm956, %v967, 0.0
    %v969 = vrot.slane %v968, 4
    %v970 = vadd.f32 %v968, %v969
    %v971 = vrot.slane %v970, 2
    %v972 = vadd.f32 %v970, %v971
    %v973 = vrot.slane %v972, 1
    %v974 = vadd.f32 %v972, %v973
    %v975 = vmul.f32 %v974, %v964
    %v976 = vadd.f32 %v975, 1e-05
    %v977 = vrsqrt.pop %v976
    %v978 = vmul.f32 %v966, %v977
    %v979 = vld [vmem:[%s4] sm:$0x1]
    %v981 = vlaneseq
    %v982 = vshrl.u32 %v981, 7
    %v983 = vsub.s32 0, %v982
    %v984 = vrot.slane %v979, %v983
    %v986 = vmul.f32 %v978, %v984
    %v987 = vld [vmem:[%s5] sm:$0x1]
    %v989 = vlaneseq
    %v990 = vshrl.u32 %v989, 7
    %v991 = vsub.s32 0, %v990
    %v992 = vrot.slane %v987, %v991
    %v994 = vadd.f32 %v986, %v992
    %vm995 = vcmp.ge.f32.partialorder %v994, 0.0
    %v996 = vmul.f32 %v994, 0.01
    %v997 = vsel %vm995, %v994, %v996
    %v998 = vpack.c.bf16 %v997, %v997
    %v999 = vld [vmem:[#allocation8] sm:$0xf]
    %v1000 = vld [vmem:[#allocation8 + $0x4] sm:$0xf]
    %v1001 = vld [vmem:[#allocation8 + $0x8] sm:$0xf]
    %v1002 = vld [vmem:[#allocation8 + $0xc] sm:$0xf]
    %v1003 = vld [vmem:[#allocation8 + $0x10] sm:$0xf]
    %v1004 = vld [vmem:[#allocation8 + $0x14] sm:$0xf]
    %v1005 = vld [vmem:[#allocation8 + $0x18] sm:$0xf]
    %v1006 = vld [vmem:[#allocation8 + $0x1c] sm:$0xf]
    %v1007 = vld [vmem:[#allocation8 + $0x20] sm:$0xf]
    %v1008 = vld [vmem:[#allocation8 + $0x24] sm:$0xf]
    %v1009 = vld [vmem:[#allocation8 + $0x28] sm:$0xf]
    %v1010 = vld [vmem:[#allocation8 + $0x2c] sm:$0xf]
    %v1011 = vld [vmem:[#allocation8 + $0x30] sm:$0xf]
    %v1012 = vld [vmem:[#allocation8 + $0x34] sm:$0xf]
    %v1013 = vld [vmem:[#allocation8 + $0x38] sm:$0xf]
    %v1014 = vld [vmem:[#allocation8 + $0x3c] sm:$0xf]
    %v1015 = vld [vmem:[%s7] sm:$0x1]
    %v1017 = vlaneseq
    %v1018 = vshrl.u32 %v1017, 7
    %v1019 = vsub.s32 0, %v1018
    %v1020 = vrot.slane %v1015, %v1019
    %v1038 = vunpack.c.l.b16 %v999
    %v1039 = vunpack.c.l.b16 %v1000
    %v1040 = vunpack.c.l.b16 %v1001
    %v1041 = vunpack.c.l.b16 %v1002
    %v1042 = vunpack.c.l.b16 %v1003
    %v1043 = vunpack.c.l.b16 %v1004
    %v1044 = vunpack.c.l.b16 %v1005
    %v1045 = vunpack.c.l.b16 %v1006
    %v1046 = vunpack.c.l.b16 %v1007
    %v1047 = vunpack.c.l.b16 %v1008
    %v1048 = vunpack.c.l.b16 %v1009
    %v1049 = vunpack.c.l.b16 %v1010
    %v1050 = vunpack.c.l.b16 %v1011
    %v1051 = vunpack.c.l.b16 %v1012
    %v1052 = vunpack.c.l.b16 %v1013
    %v1053 = vunpack.c.l.b16 %v1014
    %v1054 = vpack.c.b16 %v1039, %v1038
    %v1055 = vpack.c.b16 %v1041, %v1040
    %v1056 = vpack.c.b16 %v1043, %v1042
    %v1057 = vpack.c.b16 %v1045, %v1044
    %v1058 = vpack.c.b16 %v1047, %v1046
    %v1059 = vpack.c.b16 %v1049, %v1048
    %v1060 = vpack.c.b16 %v1051, %v1050
    %v1061 = vpack.c.b16 %v1053, %v1052
    %1070 = vmatprep.subr.bf16.mxu0 0
    %1071 = vmatpush1.bf16.msra.mxu0 %v1054
    %1072 = vmatprep.subr.bf16.mxu0 0
    %1073 = vmatpush1.bf16.msra.mxu0 %v1055
    %1074 = vmatprep.subr.bf16.mxu0 0
    %1075 = vmatpush1.bf16.msra.mxu0 %v1056
    %1076 = vmatprep.subr.bf16.mxu0 0
    %1077 = vmatpush1.bf16.msra.mxu0 %v1057
    %1078 = vmatprep.subr.bf16.mxu0 0
    %1079 = vmatpush1.bf16.msra.mxu0 %v1058
    %1080 = vmatprep.subr.bf16.mxu0 0
    %1081 = vmatpush1.bf16.msra.mxu0 %v1059
    %1082 = vmatprep.subr.bf16.mxu0 0
    %1083 = vmatpush1.bf16.msra.mxu0 %v1060
    %1084 = vmatprep.subr.bf16.mxu0 0
    %1085 = vmatpush1.bf16.msra.mxu0 %v1061
    %1086 = vmatprep.subr.bf16.mxu0 0
    %1087 = vmatpush1.bf16.msra.mxu0 0
    %1088 = vmatprep.subr.bf16.mxu0 0
    %1089 = vmatpush1.bf16.msra.mxu0 0
    %1090 = vmatprep.subr.bf16.mxu0 0
    %1091 = vmatpush1.bf16.msra.mxu0 0
    %1092 = vmatprep.subr.bf16.mxu0 0
    %1093 = vmatpush1.bf16.msra.mxu0 0
    %1094 = vmatprep.subr.bf16.mxu0 0
    %1095 = vmatpush1.bf16.msra.mxu0 0
    %1096 = vmatprep.subr.bf16.mxu0 0
    %1097 = vmatpush1.bf16.msra.mxu0 0
    %1098 = vmatprep.subr.bf16.mxu0 0
    %1099 = vmatpush1.bf16.msra.mxu0 0
    %1100 = vmatprep.subr.bf16.mxu0 0
    %1101 = vmatpush1.bf16.msra.mxu0 0
    %1102 = vmatprep.mubr.bf16.mxu0 0
    %1103 = vmatmul.mubr.bf16.gmra.mrb[0].mxu0 %v998
    %v1104 = vpop.f32.mrb[0].mxu0
    %v1105 = vadd.f32 %v1020, %v1104
    %v1106 = vpop.f32.mrb[0].mxu0
    %v1107 = vpop.f32.mrb[0].mxu0
    %v1108 = vpop.f32.mrb[0].mxu0
    %1109 = vdwg.mxu0
    %1110 = vst [vmem:[#allocation10] sm:$0x3] %v1105
    // Predicated region
    $region50: #{tpu_custom_call.1} parent=1 // pred_check
      _
    $region51: #{tpu_custom_call.1} parent=1 // pred_check_branch
      %1112 = sbr.rel (0) target = $region53
    $region52: #{tpu_custom_call.1} parent=1 // pred_region
      %s1114 = ssub.s32 32, 32
      %1115 = vsyncadd [#allocation4], %s1114
      %s1117 = sshll.u32 [#allocation10], 4
      %s1118 = int_to_ptr.vmem [resolvable:$true] %s1117
      %1120 = dma.vmem_to_hbm [thread:$0]  %s1118, 32, %s8, [#allocation4]
    $region53: #{tpu_custom_call.1} parent=1 // pred_fallthru
      _
    // Predicated region
    $region54: #{tpu_custom_call.1} parent=1 // pred_check
      _
    $region55: #{tpu_custom_call.1} parent=1 // pred_check_branch
      %1122 = sbr.rel (0) target = $region57
    $region56: #{tpu_custom_call.1} parent=1 // pred_region
      %1123 = dma.done [#allocation4], 32
    $region57: #{tpu_custom_call.1} parent=1 // pred_fallthru
      _
    %1124 = vsyncpa [#allocation3], 1
    %1125 = vsyncpa [#allocation6], 1
    %1126 = vsyncpa [#allocation9], 1
    %1127 = vsyncpa [#allocation4], 1

</llo_original>
